<compile_context>
chip_gen: v5e
topology: v5e:2x2
jax: 0.10.0
libtpu: 0.0.40
codegen_flags: <defaults>
</compile_context>

<pallas_src>
import functools

import jax
import jax.numpy as jnp
import numpy as np
from jax import lax
from jax.experimental import pallas as pl


# ----------------------------------------------------------------------------
# Fused kernel body: one (T, K) x (K, 3*hdim) matmul (projection + folded conv
# + folded q-scale) followed by per-head softmax attention.
#   x_ref: (T, K) bf16     K = D (no dconv) or 3*D (dconv folded)
#   w_ref: (K, 3*hdim) bf16
#   o_ref: (T, nH*dH) f32  lane-dense, head-major columns
# ----------------------------------------------------------------------------
def _fused_attn_kernel(x_ref, w_ref, o_ref, *, num_heads, head_dim):
    nH, dH = num_heads, head_dim
    hdim = nH * dH

    # Single MXU pass: projection (+ depthwise conv + q-scale, pre-folded).
    qkv = jnp.dot(x_ref[...], w_ref[...],
                  preferred_element_type=jnp.float32)        # (T, 3*hdim) f32
    # One wide cast for the MXU operands of the attention matmuls.
    qkv_bf = qkv.astype(jnp.bfloat16)

    # nH is tiny -> unrolled static loop; compiler interleaves the MXU pushes.
    for h in range(nH):
        q_h = qkv_bf[:, h * dH:(h + 1) * dH]
        k_h = qkv_bf[:, hdim + h * dH:hdim + (h + 1) * dH]
        v_h = qkv_bf[:, 2 * hdim + h * dH:2 * hdim + (h + 1) * dH]
        # s[i, j] = <q_i, k_j>  (scale already folded into the Q weight columns)
        s = lax.dot_general(q_h, k_h, (((1,), (1,)), ((), ())),
                            preferred_element_type=jnp.float32)
        m = jnp.max(s, axis=-1, keepdims=True)
        p = jnp.exp(s - m)
        inv_denom = pl.reciprocal(jnp.sum(p, axis=-1, keepdims=True),
                                  approx=True)
        o_h = jnp.dot(p.astype(jnp.bfloat16), v_h,
                      preferred_element_type=jnp.float32)
        # Store each head directly; no concatenate (stores are masked either
        # way at 16 < 128 lanes, so per-head slices are strictly cheaper).
        o_ref[:, h * dH:(h + 1) * dH] = (o_h * inv_denom).astype(o_ref.dtype)


def fused_qkv_conv_attention(x_in, w_in, *, num_heads, head_dim):
    T, K = x_in.shape
    C = w_in.shape[1]
    hdim = num_heads * head_dim
    kernel = functools.partial(_fused_attn_kernel,
                               num_heads=num_heads, head_dim=head_dim)
    return pl.pallas_call(
        kernel,
        out_shape=jax.ShapeDtypeStruct((T, hdim), jnp.float32),
        grid=(1,),
        in_specs=[pl.BlockSpec((T, K), lambda i: (0, 0)),
                  pl.BlockSpec((K, C), lambda i: (0, 0))],
        out_specs=pl.BlockSpec((T, hdim), lambda i: (0, 0)),
    )(x_in, w_in)


# ----------------------------------------------------------------------------
# Wrapper-side layout plumbing (all folded into the weight / a tiny pad+concat
# on x; no extra work inside the kernel).
# ----------------------------------------------------------------------------
def _fold_weights(qkv_w, wq_conv, wk_conv, wv_conv, *, num_heads, head_dim,
                  use_dconv):
    nH, dH = num_heads, head_dim
    hdim = nH * dH
    D = qkv_w.shape[-1]
    w_t = jnp.transpose(qkv_w.reshape(3 * hdim, D))          # (D, 3*hdim)

    # Fold the attention scale into the Q columns (exact for dH a power of 2).
    scale = float(dH) ** -0.5
    col_scale = jnp.concatenate([jnp.full((hdim,), scale, jnp.float32),
                                 jnp.ones((2 * hdim,), jnp.float32)])
    w_t = w_t * col_scale[None, :]

    if not use_dconv:
        return w_t

    # Per-column depthwise-conv tap (channel == column % head_dim, per section).
    def tap_row(tap):
        return jnp.concatenate([jnp.tile(wq_conv[:, tap], nH),
                                jnp.tile(wk_conv[:, tap], nH),
                                jnp.tile(wv_conv[:, tap], nH)])

    # conv(qkv)[t] = [x[t-1] | x[t] | x[t+1]] @ [W*diag(w0); W*diag(w1); W*diag(w2)]
    return jnp.concatenate([w_t * tap_row(0)[None, :],
                            w_t * tap_row(1)[None, :],
                            w_t * tap_row(2)[None, :]], axis=0)   # (3D, 3*hdim)


def _stack_time_shifts(x2d):
    """(T, D) -> (T, 3D) with zero-padded prev/next rows (conv 'same' padding)."""
    T, D = x2d.shape
    zero = jnp.zeros((1, D), x2d.dtype)
    x_prev = jnp.concatenate([zero, x2d[:-1]], axis=0)
    x_next = jnp.concatenate([x2d[1:], zero], axis=0)
    return jnp.concatenate([x_prev, x2d, x_next], axis=1)


def test_model_forward(x, qkv_w, wq_conv, wk_conv, wv_conv,
                       num_heads, head_dim, use_dconv=True):
    B, T, D = x.shape
    assert B == 1, "Must use batch size = 1 (matches the torch module assert)"
    nH, dH = num_heads, head_dim

    w_folded = _fold_weights(qkv_w, wq_conv, wk_conv, wv_conv,
                             num_heads=nH, head_dim=dH, use_dconv=use_dconv)
    x2d = x[0]
    x_in = _stack_time_shifts(x2d) if use_dconv else x2d

    out2d = fused_qkv_conv_attention(x_in.astype(jnp.bfloat16),
                                     w_folded.astype(jnp.bfloat16),
                                     num_heads=nH, head_dim=dH)   # (T, nH*dH)
    return out2d.reshape(T, nH, dH)[None]                         # (1, T, nH, dH)


# ----------------------------------------------------------------------------
# Pure-JAX f32 reference (mirrors the PyTorch forward) for self-validation.
# ----------------------------------------------------------------------------
def reference_forward(x, qkv_w, wq_conv, wk_conv, wv_conv,
                      num_heads, head_dim, use_dconv=True):
    B, T, D = x.shape
    nH, dH = num_heads, head_dim
    hdim = nH * dH
    qkv = jnp.einsum("btd,cd->btc", x, qkv_w.reshape(3 * hdim, D))
    qkv = qkv.reshape(B, T, 3 * nH, dH)
    q, k, v = qkv[:, :, :nH], qkv[:, :, nH:2 * nH], qkv[:, :, 2 * nH:]

    def dconv(t, w):  # t: (B, T, nH, dH), w: (dH, 3)
        tp = jnp.pad(t, ((0, 0), (1, 1), (0, 0), (0, 0)))
        return tp[:, :-2] * w[:, 0] + tp[:, 1:-1] * w[:, 1] + tp[:, 2:] * w[:, 2]

    if use_dconv:
        q, k, v = dconv(q, wq_conv), dconv(k, wk_conv), dconv(v, wv_conv)
    scale = float(dH) ** -0.5
    s = jnp.einsum("bqhd,bkhd->bhqk", q, k) * scale
    p = jax.nn.softmax(s, axis=-1)
    return jnp.einsum("bhqk,bkhd->bqhd", p, v)


if __name__ == "__main__":
    num_heads, head_dim, dim = 4, 16, 32
    T = 8
    hdim = num_heads * head_dim

    key = jax.random.PRNGKey(0)
    k1, k2, k3, k4, k5 = jax.random.split(key, 5)

    # qkv_w ~ U(-bound, bound), bound = sqrt(3) * 0.5 * dim^-0.5 (as in __init__)
    std = 0.5 * dim ** (-0.5)
    bound = (3.0 ** 0.5) * std
    qkv_w = jax.random.uniform(k1, (3, hdim, dim), jnp.float32, -bound, bound)

    # depthwise Conv1d(head_dim, head_dim, 3, groups=head_dim, bias=False):
    # weight (head_dim, 1, 3) -> stored here as (head_dim, 3).
    # torch default init: kaiming_uniform, fan_in = 1*3 -> bound = 1/sqrt(3);
    # stored as bf16 in the module, mimicked by a round-trip cast.
    conv_bound = (1.0 / 3.0) ** 0.5
    def conv_init(k):
        w = jax.random.uniform(k, (head_dim, 3), jnp.float32, -conv_bound,
                               conv_bound)
        return w.astype(jnp.bfloat16).astype(jnp.float32)
    wq_conv, wk_conv, wv_conv = conv_init(k2), conv_init(k3), conv_init(k4)

    x = jax.random.normal(k5, (1, T, dim), jnp.float32)

    ok = True
    for use_dconv in (True, False):
        fwd = jax.jit(functools.partial(test_model_forward,
                                        num_heads=num_heads, head_dim=head_dim,
                                        use_dconv=use_dconv))
        out = fwd(x, qkv_w, wq_conv, wk_conv, wv_conv)
        out = jax.block_until_ready(out)
        ref = reference_forward(x, qkv_w, wq_conv, wk_conv, wv_conv,
                                num_heads, head_dim, use_dconv=use_dconv)
        assert out.shape == (1, T, num_heads, head_dim), out.shape
        # Tolerance accounts for bf16 MXU operands (incl. the bf16 folded
        # weight) + approx reciprocal vs. the pure-f32 reference.
        np.testing.assert_allclose(np.asarray(out), np.asarray(ref),
                                   rtol=2e-2, atol=2e-2)
    if ok:
        print("KERNEL_OK")
</pallas_src>

<mosaic_0001>
module attributes {stable_mosaic.version = 11 : i64} {
  func.func @_fused_attn_kernel(%arg0: i32, %arg1: memref<8x96xbf16, #tpu.memory_space<vmem>>, %arg2: memref<96x192xbf16, #tpu.memory_space<vmem>>, %arg3: memref<8x64xf32, #tpu.memory_space<vmem>>) attributes {dimension_semantics = [#tpu.dimension_semantics<arbitrary>], iteration_bounds = array<i64: 1>, scalar_prefetch = 0 : i64, scratch_operands = 0 : i64, tpu.core_type = #tpu.core_type<tc>, window_params = [{pipeline_mode = #tpu.pipeline_mode<synchronous>, transform_indices = @transform_0, window_bounds = array<i64: 8, 96>}, {pipeline_mode = #tpu.pipeline_mode<synchronous>, transform_indices = @transform_1, window_bounds = array<i64: 96, 192>}, {pipeline_mode = #tpu.pipeline_mode<synchronous>, transform_indices = @transform_2, window_bounds = array<i64: 8, 64>}]} {
    %c0 = arith.constant 0 : index
    %c0_0 = arith.constant 0 : index
    %0 = vector.load %arg1[%c0, %c0_0] : memref<8x96xbf16, #tpu.memory_space<vmem>>, vector<8x96xbf16>
    %c0_1 = arith.constant 0 : index
    %c0_2 = arith.constant 0 : index
    %1 = vector.load %arg2[%c0_1, %c0_2] : memref<96x192xbf16, #tpu.memory_space<vmem>>, vector<96x192xbf16>
    %cst = arith.constant dense<0.000000e+00> : vector<8x192xf32>
    %2 = tpu.matmul %0, %1, %cst {dimension_numbers = #tpu.dot_dimension_numbers<[1], [0], [0], [1], [0, 0, 1, 1], [], []>} : vector<8x96xbf16>, vector<96x192xbf16>, vector<8x192xf32> -> vector<8x192xf32>
    %3 = arith.truncf %2 : vector<8x192xf32> to vector<8x192xbf16>
    %4 = vector.extract_strided_slice %3 {offsets = [0, 0], sizes = [8, 16], strides = [1, 1]} : vector<8x192xbf16> to vector<8x16xbf16>
    %5 = vector.extract_strided_slice %3 {offsets = [0, 64], sizes = [8, 16], strides = [1, 1]} : vector<8x192xbf16> to vector<8x16xbf16>
    %6 = vector.extract_strided_slice %3 {offsets = [0, 128], sizes = [8, 16], strides = [1, 1]} : vector<8x192xbf16> to vector<8x16xbf16>
    %cst_3 = arith.constant dense<0.000000e+00> : vector<8x8xf32>
    %7 = tpu.matmul %4, %5, %cst_3 {dimension_numbers = #tpu.dot_dimension_numbers<[1], [1], [0], [0], [0, 0, 1, 0], [], []>} : vector<8x16xbf16>, vector<8x16xbf16>, vector<8x8xf32> -> vector<8x8xf32>
    %cst_4 = arith.constant dense<0xFF800000> : vector<8xf32>
    %8 = vector.multi_reduction <maximumf>, %7, %cst_4 [1] : vector<8x8xf32> to vector<8xf32>
    %9 = vector.shape_cast %8 : vector<8xf32> to vector<8x1xf32>
    %10 = vector.broadcast %9 : vector<8x1xf32> to vector<8x8xf32>
    %11 = arith.subf %7, %10 : vector<8x8xf32>
    %12 = math.exp %11 : vector<8x8xf32>
    %cst_5 = arith.constant dense<0.000000e+00> : vector<8xf32>
    %13 = vector.multi_reduction <add>, %12, %cst_5 [1] : vector<8x8xf32> to vector<8xf32>
    %14 = vector.shape_cast %13 : vector<8xf32> to vector<8x1xf32>
    %15 = tpu.reciprocal %14 {approx = true} : vector<8x1xf32> -> vector<8x1xf32>
    %16 = arith.truncf %12 : vector<8x8xf32> to vector<8x8xbf16>
    %cst_6 = arith.constant dense<0.000000e+00> : vector<8x16xf32>
    %17 = tpu.matmul %16, %6, %cst_6 {dimension_numbers = #tpu.dot_dimension_numbers<[1], [0], [0], [1], [0, 0, 1, 1], [], []>} : vector<8x8xbf16>, vector<8x16xbf16>, vector<8x16xf32> -> vector<8x16xf32>
    %18 = vector.broadcast %15 : vector<8x1xf32> to vector<8x16xf32>
    %19 = arith.mulf %17, %18 : vector<8x16xf32>
    %c0_7 = arith.constant 0 : index
    %c0_8 = arith.constant 0 : index
    %20 = vector.load %arg3[%c0_7, %c0_8] : memref<8x64xf32, #tpu.memory_space<vmem>>, vector<8x16xf32>
    tpu.vector_store %arg3[%c0_7, %c0_8], %19 {strides = array<i32>} : memref<8x64xf32, #tpu.memory_space<vmem>>, vector<8x16xf32>,
    %21 = vector.extract_strided_slice %3 {offsets = [0, 16], sizes = [8, 16], strides = [1, 1]} : vector<8x192xbf16> to vector<8x16xbf16>
    %22 = vector.extract_strided_slice %3 {offsets = [0, 80], sizes = [8, 16], strides = [1, 1]} : vector<8x192xbf16> to vector<8x16xbf16>
    %23 = vector.extract_strided_slice %3 {offsets = [0, 144], sizes = [8, 16], strides = [1, 1]} : vector<8x192xbf16> to vector<8x16xbf16>
    %cst_9 = arith.constant dense<0.000000e+00> : vector<8x8xf32>
    %24 = tpu.matmul %21, %22, %cst_9 {dimension_numbers = #tpu.dot_dimension_numbers<[1], [1], [0], [0], [0, 0, 1, 0], [], []>} : vector<8x16xbf16>, vector<8x16xbf16>, vector<8x8xf32> -> vector<8x8xf32>
    %cst_10 = arith.constant dense<0xFF800000> : vector<8xf32>
    %25 = vector.multi_reduction <maximumf>, %24, %cst_10 [1] : vector<8x8xf32> to vector<8xf32>
    %26 = vector.shape_cast %25 : vector<8xf32> to vector<8x1xf32>
    %27 = vector.broadcast %26 : vector<8x1xf32> to vector<8x8xf32>
    %28 = arith.subf %24, %27 : vector<8x8xf32>
    %29 = math.exp %28 : vector<8x8xf32>
    %cst_11 = arith.constant dense<0.000000e+00> : vector<8xf32>
    %30 = vector.multi_reduction <add>, %29, %cst_11 [1] : vector<8x8xf32> to vector<8xf32>
    %31 = vector.shape_cast %30 : vector<8xf32> to vector<8x1xf32>
    %32 = tpu.reciprocal %31 {approx = true} : vector<8x1xf32> -> vector<8x1xf32>
    %33 = arith.truncf %29 : vector<8x8xf32> to vector<8x8xbf16>
    %cst_12 = arith.constant dense<0.000000e+00> : vector<8x16xf32>
    %34 = tpu.matmul %33, %23, %cst_12 {dimension_numbers = #tpu.dot_dimension_numbers<[1], [0], [0], [1], [0, 0, 1, 1], [], []>} : vector<8x8xbf16>, vector<8x16xbf16>, vector<8x16xf32> -> vector<8x16xf32>
    %35 = vector.broadcast %32 : vector<8x1xf32> to vector<8x16xf32>
    %36 = arith.mulf %34, %35 : vector<8x16xf32>
    %c0_13 = arith.constant 0 : index
    %c16 = arith.constant 16 : index
    %37 = vector.load %arg3[%c0_13, %c16] : memref<8x64xf32, #tpu.memory_space<vmem>>, vector<8x16xf32>
    tpu.vector_store %arg3[%c0_13, %c16], %36 {strides = array<i32>} : memref<8x64xf32, #tpu.memory_space<vmem>>, vector<8x16xf32>,
    %38 = vector.extract_strided_slice %3 {offsets = [0, 32], sizes = [8, 16], strides = [1, 1]} : vector<8x192xbf16> to vector<8x16xbf16>
    %39 = vector.extract_strided_slice %3 {offsets = [0, 96], sizes = [8, 16], strides = [1, 1]} : vector<8x192xbf16> to vector<8x16xbf16>
    %40 = vector.extract_strided_slice %3 {offsets = [0, 160], sizes = [8, 16], strides = [1, 1]} : vector<8x192xbf16> to vector<8x16xbf16>
    %cst_14 = arith.constant dense<0.000000e+00> : vector<8x8xf32>
    %41 = tpu.matmul %38, %39, %cst_14 {dimension_numbers = #tpu.dot_dimension_numbers<[1], [1], [0], [0], [0, 0, 1, 0], [], []>} : vector<8x16xbf16>, vector<8x16xbf16>, vector<8x8xf32> -> vector<8x8xf32>
    %cst_15 = arith.constant dense<0xFF800000> : vector<8xf32>
    %42 = vector.multi_reduction <maximumf>, %41, %cst_15 [1] : vector<8x8xf32> to vector<8xf32>
    %43 = vector.shape_cast %42 : vector<8xf32> to vector<8x1xf32>
    %44 = vector.broadcast %43 : vector<8x1xf32> to vector<8x8xf32>
    %45 = arith.subf %41, %44 : vector<8x8xf32>
    %46 = math.exp %45 : vector<8x8xf32>
    %cst_16 = arith.constant dense<0.000000e+00> : vector<8xf32>
    %47 = vector.multi_reduction <add>, %46, %cst_16 [1] : vector<8x8xf32> to vector<8xf32>
    %48 = vector.shape_cast %47 : vector<8xf32> to vector<8x1xf32>
    %49 = tpu.reciprocal %48 {approx = true} : vector<8x1xf32> -> vector<8x1xf32>
    %50 = arith.truncf %46 : vector<8x8xf32> to vector<8x8xbf16>
    %cst_17 = arith.constant dense<0.000000e+00> : vector<8x16xf32>
    %51 = tpu.matmul %50, %40, %cst_17 {dimension_numbers = #tpu.dot_dimension_numbers<[1], [0], [0], [1], [0, 0, 1, 1], [], []>} : vector<8x8xbf16>, vector<8x16xbf16>, vector<8x16xf32> -> vector<8x16xf32>
    %52 = vector.broadcast %49 : vector<8x1xf32> to vector<8x16xf32>
    %53 = arith.mulf %51, %52 : vector<8x16xf32>
    %c0_18 = arith.constant 0 : index
    %c32 = arith.constant 32 : index
    %54 = vector.load %arg3[%c0_18, %c32] : memref<8x64xf32, #tpu.memory_space<vmem>>, vector<8x16xf32>
    tpu.vector_store %arg3[%c0_18, %c32], %53 {strides = array<i32>} : memref<8x64xf32, #tpu.memory_space<vmem>>, vector<8x16xf32>,
    %55 = vector.extract_strided_slice %3 {offsets = [0, 48], sizes = [8, 16], strides = [1, 1]} : vector<8x192xbf16> to vector<8x16xbf16>
    %56 = vector.extract_strided_slice %3 {offsets = [0, 112], sizes = [8, 16], strides = [1, 1]} : vector<8x192xbf16> to vector<8x16xbf16>
    %57 = vector.extract_strided_slice %3 {offsets = [0, 176], sizes = [8, 16], strides = [1, 1]} : vector<8x192xbf16> to vector<8x16xbf16>
    %cst_19 = arith.constant dense<0.000000e+00> : vector<8x8xf32>
    %58 = tpu.matmul %55, %56, %cst_19 {dimension_numbers = #tpu.dot_dimension_numbers<[1], [1], [0], [0], [0, 0, 1, 0], [], []>} : vector<8x16xbf16>, vector<8x16xbf16>, vector<8x8xf32> -> vector<8x8xf32>
    %cst_20 = arith.constant dense<0xFF800000> : vector<8xf32>
    %59 = vector.multi_reduction <maximumf>, %58, %cst_20 [1] : vector<8x8xf32> to vector<8xf32>
    %60 = vector.shape_cast %59 : vector<8xf32> to vector<8x1xf32>
    %61 = vector.broadcast %60 : vector<8x1xf32> to vector<8x8xf32>
    %62 = arith.subf %58, %61 : vector<8x8xf32>
    %63 = math.exp %62 : vector<8x8xf32>
    %cst_21 = arith.constant dense<0.000000e+00> : vector<8xf32>
    %64 = vector.multi_reduction <add>, %63, %cst_21 [1] : vector<8x8xf32> to vector<8xf32>
    %65 = vector.shape_cast %64 : vector<8xf32> to vector<8x1xf32>
    %66 = tpu.reciprocal %65 {approx = true} : vector<8x1xf32> -> vector<8x1xf32>
    %67 = arith.truncf %63 : vector<8x8xf32> to vector<8x8xbf16>
    %cst_22 = arith.constant dense<0.000000e+00> : vector<8x16xf32>
    %68 = tpu.matmul %67, %57, %cst_22 {dimension_numbers = #tpu.dot_dimension_numbers<[1], [0], [0], [1], [0, 0, 1, 1], [], []>} : vector<8x8xbf16>, vector<8x16xbf16>, vector<8x16xf32> -> vector<8x16xf32>
    %69 = vector.broadcast %66 : vector<8x1xf32> to vector<8x16xf32>
    %70 = arith.mulf %68, %69 : vector<8x16xf32>
    %c0_23 = arith.constant 0 : index
    %c48 = arith.constant 48 : index
    %71 = vector.load %arg3[%c0_23, %c48] : memref<8x64xf32, #tpu.memory_space<vmem>>, vector<8x16xf32>
    tpu.vector_store %arg3[%c0_23, %c48], %70 {strides = array<i32>} : memref<8x64xf32, #tpu.memory_space<vmem>>, vector<8x16xf32>,
    return
  }
  func.func @transform_0(%arg0: i32) -> (i32, i32) {
    %c0_i32 = arith.constant 0 : i32
    %c0_i32_0 = arith.constant 0 : i32
    %c0_i32_1 = arith.constant 0 : i32
    return %c0_i32, %c0_i32_0 : i32, i32
  }
  func.func @transform_1(%arg0: i32) -> (i32, i32) {
    %c0_i32 = arith.constant 0 : i32
    %c0_i32_0 = arith.constant 0 : i32
    %c0_i32_1 = arith.constant 0 : i32
    return %c0_i32, %c0_i32_0 : i32, i32
  }
  func.func @transform_2(%arg0: i32) -> (i32, i32) {
    %c0_i32 = arith.constant 0 : i32
    %c0_i32_0 = arith.constant 0 : i32
    %c0_i32_1 = arith.constant 0 : i32
    return %c0_i32, %c0_i32_0 : i32, i32
  }
}

</mosaic_0001>

<llo_original>
// kernel: tile.47
$region0: #{tile.47}
  %s0 = inlined_call_operand.vmem [shape: f32[4,16], index: 0, kind: input, shape index: {}]
  %s1 = inlined_call_operand.vmem [shape: f32[64], index: 1, kind: output, shape index: {}]
  $region1: #{tile.47} parent=0
    #allocation0 [shape = 'u8[4096]{0}', space=vmem, size = 0x1000, scoped, tag = 'scoped mem for output reshape']
    #allocation1 [shape = 'u8[4096]{0}', space=vmem, size = 0x1000, scoped, tag = 'scoped mem for input reshape']
    %s3 = ssub.s32 16, 1
    %v4 = vld [vmem:[%s0] sm:%s3]
    %5 = vst [vmem:[#allocation1] sm:%s3] %v4
    %v6 = vld [vmem:[#allocation1] sm:$0x1]
    %vm7 = vcmask 130048
    %8 = vst.msk [vmem:[#allocation0] sm:$0x1] %vm7, %v6
    %s9 = scalar_lea.vmem [#allocation1], 3
    %v10 = vld [vmem:[%s9] sm:$0x1]
    %11 = vrot.lane.b32.xlu0 %v10, 48
    %v12 = vpop.permute.xlu0 %11
    %vm13 = vcmask 523648
    %14 = vst.msk [vmem:[#allocation0] sm:$0x1] %vm13, %v12
    %s15 = scalar_lea.vmem [#allocation1], 2
    %v16 = vld [vmem:[%s15] sm:$0x1]
    %17 = vrot.lane.b32.xlu0 %v16, 32
    %v18 = vpop.permute.xlu0 %17
    %vm19 = vcmask 392448
    %20 = vst.msk [vmem:[#allocation0] sm:$0x1] %vm19, %v18
    %s21 = scalar_lea.vmem [#allocation1], 1
    %v22 = vld [vmem:[%s21] sm:$0x1]
    %23 = vrot.lane.b32.xlu0 %v22, 16
    %v24 = vpop.permute.xlu0 %23
    %vm25 = vcmask 261248
    %26 = vst.msk [vmem:[#allocation0] sm:$0x1] %vm25, %v24
    %s28 = ssub.s32 2, 1
    %v29 = vld [vmem:[#allocation0] sm:%s28]
    %s31 = ssub.s32 2, 1
    %32 = vst [vmem:[%s1] sm:%s31] %v29

// kernel: tile.46
$region0: #{tile.46}
  #allocation0 [shape = 's32[1]{0}', space=sflag, size = 0x4, scoped, tag = 'scoped memory for tile.46']
  %s0 = inlined_call_operand.vmem [shape: f32[16], index: 0, kind: input, shape index: {}]
  %s1 = inlined_call_operand.vmem [shape: f32[4,16], index: 1, kind: output, shape index: {}]
  // Predicated region
  $region2: #{tile.46} parent=0 // pred_check
    _
  $region3: #{tile.46} parent=0 // pred_check_branch
    %3 = sbr.rel (0) target = $region5
  $region4: #{tile.46} parent=0 // pred_region
    _
  $region5: #{tile.46} parent=0 // pred_fallthru
    _
  %v4 = vld [vmem:[%s0] ss:$0 sm:$0xff]
  %5 = vst [vmem:[%s1] sm:$0xf] %v4

// kernel: test_model_forward.1
$region0: #{test_model_forward.1}
  #allocation0 [shape = 'u32[]', space=smem, size = 0x4, offset = 0x4, fixed_abs, tag = 'smem constant byte address 0x4 - core index']
  #allocation1 [shape = 'u32[72,128]{1,0:T(1,128)}', space=vmem, size = 0x9000, scoped, tag = 'internal scratch']
  %s0 = inlined_call_operand.vmem [shape: bf16[8,96], index: 0, kind: input, shape index: {}]
  %s1 = inlined_call_operand.vmem [shape: bf16[96,192], index: 1, kind: input, shape index: {}]
  %s2 = inlined_call_operand.vmem [shape: f32[8,64], index: 2, kind: output, shape index: {}]
  %s3 = sld [smem:[#allocation0]]
  $region18: #{test_model_forward.1} parent=0
    _
  %s5 = ssub.s32 1, %s3
  %s6 = scalar_select 0, %s5, %s3
  // Predicated region
  $region2: #{test_model_forward.1} parent=0 // pred_check
    _
  $region3: #{test_model_forward.1} parent=0 // pred_check_branch
    %8 = sbr.rel (0) target = $region5
  $region4: #{test_model_forward.1} parent=0 // pred_region
    _
  $region5: #{test_model_forward.1} parent=0 // pred_fallthru
    _
  // Predicated region
  $region6: #{test_model_forward.1} parent=0 // pred_check
    _
  $region7: #{test_model_forward.1} parent=0 // pred_check_branch
    %10 = sbr.rel (0) target = $region9
  $region8: #{test_model_forward.1} parent=0 // pred_region
    _
  $region9: #{test_model_forward.1} parent=0 // pred_fallthru
    _
  %v12 = vld [vmem:[%s0] sm:$0xf]
  %v13 = vld [vmem:[%s1] sm:$0xff]
  %v14 = vld [vmem:[%s1 + $0x8] sm:$0xff]
  %v15 = vld [vmem:[%s1 + $0x10] sm:$0xff]
  %v16 = vld [vmem:[%s1 + $0x18] sm:$0xff]
  %v17 = vld [vmem:[%s1 + $0x20] sm:$0xff]
  %v18 = vld [vmem:[%s1 + $0x28] sm:$0xff]
  %v19 = vld [vmem:[%s1 + $0x30] sm:$0xff]
  %v20 = vld [vmem:[%s1 + $0x38] sm:$0xff]
  %v21 = vld [vmem:[%s1 + $0x40] sm:$0xff]
  %v22 = vld [vmem:[%s1 + $0x48] sm:$0xff]
  %v23 = vld [vmem:[%s1 + $0x50] sm:$0xff]
  %v24 = vld [vmem:[%s1 + $0x58] sm:$0xff]
  %v37 = vunpack.c.l.b16 %v13
  %v38 = vunpack.c.h.b16 %v13
  %v39 = vunpack.c.l.b16 %v14
  %v40 = vunpack.c.h.b16 %v14
  %v41 = vunpack.c.l.b16 %v15
  %v42 = vunpack.c.h.b16 %v15
  %v43 = vunpack.c.l.b16 %v16
  %v44 = vunpack.c.h.b16 %v16
  %v45 = vunpack.c.l.b16 %v17
  %v46 = vunpack.c.h.b16 %v17
  %v47 = vunpack.c.l.b16 %v18
  %v48 = vunpack.c.h.b16 %v18
  %v49 = vunpack.c.l.b16 %v19
  %v50 = vunpack.c.h.b16 %v19
  %v51 = vunpack.c.l.b16 %v20
  %v52 = vunpack.c.h.b16 %v20
  %v53 = vunpack.c.l.b16 %v21
  %v54 = vunpack.c.h.b16 %v21
  %v55 = vunpack.c.l.b16 %v22
  %v56 = vunpack.c.h.b16 %v22
  %v57 = vunpack.c.l.b16 %v23
  %v58 = vunpack.c.h.b16 %v23
  %v59 = vunpack.c.l.b16 %v24
  %v60 = vunpack.c.h.b16 %v24
  %v61 = vpack.c.b16 %v39, %v37
  %v62 = vpack.c.b16 %v40, %v38
  %v63 = vpack.c.b16 %v43, %v41
  %v64 = vpack.c.b16 %v44, %v42
  %v65 = vpack.c.b16 %v47, %v45
  %v66 = vpack.c.b16 %v48, %v46
  %v67 = vpack.c.b16 %v51, %v49
  %v68 = vpack.c.b16 %v52, %v50
  %v69 = vpack.c.b16 %v55, %v53
  %v70 = vpack.c.b16 %v56, %v54
  %v71 = vpack.c.b16 %v59, %v57
  %v72 = vpack.c.b16 %v60, %v58
  %vm85 = vcmask 785408
  %v87 = vsel %vm85, %v12, 0
  %89 = vmatpush.bf16.msra.mxu0 0
  %90 = vmatpush.bf16.msra.mxu0 0
  %91 = vmatpush.bf16.msra.mxu0 %v71
  %92 = vmatpush.bf16.msra.mxu0 %v69
  %93 = vmatpush.bf16.msra.mxu0 %v67
  %94 = vmatpush.bf16.msra.mxu0 %v65
  %95 = vmatpush.bf16.msra.mxu0 %v63
  %96 = vmatpush.bf16.msra.mxu0 %v61
  %97 = vmatmul.bf16.gmra.mxu0 %v87
  %v98 = vpop.f32.mrf.mxu0
  %v99 = vadd.f32 0.0, %v98
  %v100 = vpop.f32.mrf.mxu0
  %101 = vdwg.mxu0
  %102 = vmatpush.bf16.msra.mxu0 0
  %103 = vmatpush.bf16.msra.mxu0 0
  %104 = vmatpush.bf16.msra.mxu0 %v72
  %105 = vmatpush.bf16.msra.mxu0 %v70
  %106 = vmatpush.bf16.msra.mxu0 %v68
  %107 = vmatpush.bf16.msra.mxu0 %v66
  %108 = vmatpush.bf16.msra.mxu0 %v64
  %109 = vmatpush.bf16.msra.mxu0 %v62
  %110 = vmatmul.bf16.gmra.mxu0 %v87
  %v111 = vpop.f32.mrf.mxu0
  %v112 = vadd.f32 0.0, %v111
  %v113 = vpop.f32.mrf.mxu0
  %114 = vdwg.mxu0
  %v115 = vpack.c.bf16 %v112, %v99
  %v117 = vunpack.c.l.b16 %v115
  %v118 = vpack.c.b16 %v117, %v117
  %119 = vrot.lane.b32.xlu0 %v118, 64
  %v120 = vpop.permute.xlu0 %119
  %vm121 = vcmask 130048
  %v123 = vsel %vm121, %v115, 0
  %v126 = vsel %vm121, %v120, 0
  %128 = vmatpush.bf16.xpose.msra.mxu0 0
  %129 = vmatpush.bf16.xpose.msra.mxu0 0
  %130 = vmatpush.bf16.xpose.msra.mxu0 0
  %131 = vmatpush.bf16.xpose.msra.mxu0 0
  %132 = vmatpush.bf16.xpose.msra.mxu0 0
  %133 = vmatpush.bf16.xpose.msra.mxu0 0
  %134 = vmatpush.bf16.xpose.msra.mxu0 0
  %135 = vmatpush.bf16.xpose.msra.mxu0 %v126
  %136 = vmatmul.bf16.gmra.mxu0 %v123
  %v137 = vpop.f32.mrf.mxu0
  %v138 = vadd.f32 0.0, %v137
  %v139 = vpop.f32.mrf.mxu0
  %140 = vdwg.mxu0
  %vm141 = vcmask 64512
  %v142 = vsel %vm141, %v138, -inf
  %143 = vmax.xlane.f32.xlu0 %v142
  %v144 = vpop.xlane.xlu0 %143
  %v145 = vsub.f32 %v138, %v144
  %v146 = vmul.f32 %v145, 1.442695
  %v147 = vpow.pop %v146
  %v148 = vsel %vm141, %v147, 0.0
  %149 = vadd.xlane.f32.xlu0 %v148
  %v150 = vpop.xlane.xlu0 %149
  %v151 = vrcp.pop %v150
  %v152 = vpack.c.bf16 %v147, %v147
  %v153 = vunpack.c.h.b16 %v115
  %v154 = vpack.c.b16 %v153, %v153
  %v156 = vsel %vm141, %v152, 0
  %vm158 = vcmask 1043456
  %v160 = vsel %vm158, %v154, 0
  %162 = vmatpush.bf16.msra.mxu0 0
  %163 = vmatpush.bf16.msra.mxu0 0
  %164 = vmatpush.bf16.msra.mxu0 0
  %165 = vmatpush.bf16.msra.mxu0 0
  %166 = vmatpush.bf16.msra.mxu0 0
  %167 = vmatpush.bf16.msra.mxu0 0
  %168 = vmatpush.bf16.msra.mxu0 0
  %169 = vmatpush.bf16.msra.mxu0 %v160
  %170 = vmatmul.bf16.gmra.mxu0 %v156
  %v171 = vpop.f32.mrf.mxu0
  %v172 = vadd.f32 0.0, %v171
  %v173 = vpop.f32.mrf.mxu0
  %174 = vdwg.mxu0
  %v175 = vmul.f32 %v172, %v151
  %176 = vst.msk [vmem:[%s2] sm:$0xff] %vm121, %v175
  %177 = vrot.lane.b32.xlu0 %v118, 112
  %v178 = vpop.permute.xlu0 %177
  %179 = vrot.lane.b32.xlu0 %v118, 48
  %v180 = vpop.permute.xlu0 %179
  %v182 = vsel %vm121, %v178, 0
  %v185 = vsel %vm121, %v180, 0
  %187 = vmatpush.bf16.xpose.msra.mxu0 0
  %188 = vmatpush.bf16.xpose.msra.mxu0 0
  %189 = vmatpush.bf16.xpose.msra.mxu0 0
  %190 = vmatpush.bf16.xpose.msra.mxu0 0
  %191 = vmatpush.bf16.xpose.msra.mxu0 0
  %192 = vmatpush.bf16.xpose.msra.mxu0 0
  %193 = vmatpush.bf16.xpose.msra.mxu0 0
  %194 = vmatpush.bf16.xpose.msra.mxu0 %v185
  %195 = vmatmul.bf16.gmra.mxu0 %v182
  %v196 = vpop.f32.mrf.mxu0
  %v197 = vadd.f32 0.0, %v196
  %v198 = vpop.f32.mrf.mxu0
  %199 = vdwg.mxu0
  %v200 = vsel %vm141, %v197, -inf
  %201 = vmax.xlane.f32.xlu0 %v200
  %v202 = vpop.xlane.xlu0 %201
  %v203 = vsub.f32 %v197, %v202
  %v204 = vmul.f32 %v203, 1.442695
  %v205 = vpow.pop %v204
  %v206 = vsel %vm141, %v205, 0.0
  %207 = vadd.xlane.f32.xlu0 %v206
  %v208 = vpop.xlane.xlu0 %207
  %v209 = vrcp.pop %v208
  %v210 = vpack.c.bf16 %v205, %v205
  %211 = vrot.lane.b32.xlu0 %v154, 112
  %v212 = vpop.permute.xlu0 %211
  %v214 = vsel %vm141, %v210, 0
  %v217 = vsel %vm158, %v212, 0
  %219 = vmatpush.bf16.msra.mxu0 0
  %220 = vmatpush.bf16.msra.mxu0 0
  %221 = vmatpush.bf16.msra.mxu0 0
  %222 = vmatpush.bf16.msra.mxu0 0
  %223 = vmatpush.bf16.msra.mxu0 0
  %224 = vmatpush.bf16.msra.mxu0 0
  %225 = vmatpush.bf16.msra.mxu0 0
  %226 = vmatpush.bf16.msra.mxu0 %v217
  %227 = vmatmul.bf16.gmra.mxu0 %v214
  %v228 = vpop.f32.mrf.mxu0
  %v229 = vadd.f32 0.0, %v228
  %v230 = vpop.f32.mrf.mxu0
  %231 = vdwg.mxu0
  %v232 = vmul.f32 %v229, %v209
  %234 = vrot.lane.b32.xlu0 %v232, 16
  %v235 = vpop.permute.xlu0 %234
  %vm237 = vcmask 261248
  %238 = vst.msk [vmem:[%s2] sm:$0xff] %vm237, %v235
  %239 = vrot.lane.b32.xlu0 %v118, 96
  %v240 = vpop.permute.xlu0 %239
  %241 = vrot.lane.b32.xlu0 %v118, 32
  %v242 = vpop.permute.xlu0 %241
  %v244 = vsel %vm121, %v240, 0
  %v247 = vsel %vm121, %v242, 0
  %249 = vmatpush.bf16.xpose.msra.mxu0 0
  %250 = vmatpush.bf16.xpose.msra.mxu0 0
  %251 = vmatpush.bf16.xpose.msra.mxu0 0
  %252 = vmatpush.bf16.xpose.msra.mxu0 0
  %253 = vmatpush.bf16.xpose.msra.mxu0 0
  %254 = vmatpush.bf16.xpose.msra.mxu0 0
  %255 = vmatpush.bf16.xpose.msra.mxu0 0
  %256 = vmatpush.bf16.xpose.msra.mxu0 %v247
  %257 = vmatmul.bf16.gmra.mxu0 %v244
  %v258 = vpop.f32.mrf.mxu0
  %v259 = vadd.f32 0.0, %v258
  %v260 = vpop.f32.mrf.mxu0
  %261 = vdwg.mxu0
  %v262 = vsel %vm141, %v259, -inf
  %263 = vmax.xlane.f32.xlu0 %v262
  %v264 = vpop.xlane.xlu0 %263
  %v265 = vsub.f32 %v259, %v264
  %v266 = vmul.f32 %v265, 1.442695
  %v267 = vpow.pop %v266
  %v268 = vsel %vm141, %v267, 0.0
  %269 = vadd.xlane.f32.xlu0 %v268
  %v270 = vpop.xlane.xlu0 %269
  %v271 = vrcp.pop %v270
  %v272 = vpack.c.bf16 %v267, %v267
  %273 = vrot.lane.b32.xlu0 %v154, 96
  %v274 = vpop.permute.xlu0 %273
  %v276 = vsel %vm141, %v272, 0
  %v279 = vsel %vm158, %v274, 0
  %281 = vmatpush.bf16.msra.mxu0 0
  %282 = vmatpush.bf16.msra.mxu0 0
  %283 = vmatpush.bf16.msra.mxu0 0
  %284 = vmatpush.bf16.msra.mxu0 0
  %285 = vmatpush.bf16.msra.mxu0 0
  %286 = vmatpush.bf16.msra.mxu0 0
  %287 = vmatpush.bf16.msra.mxu0 0
  %288 = vmatpush.bf16.msra.mxu0 %v279
  %289 = vmatmul.bf16.gmra.mxu0 %v276
  %v290 = vpop.f32.mrf.mxu0
  %v291 = vadd.f32 0.0, %v290
  %v292 = vpop.f32.mrf.mxu0
  %293 = vdwg.mxu0
  %v294 = vmul.f32 %v291, %v271
  %296 = vrot.lane.b32.xlu0 %v294, 32
  %v297 = vpop.permute.xlu0 %296
  %vm299 = vcmask 392448
  %300 = vst.msk [vmem:[%s2] sm:$0xff] %vm299, %v297
  %301 = vrot.lane.b32.xlu0 %v118, 80
  %v302 = vpop.permute.xlu0 %301
  %303 = vrot.lane.b32.xlu0 %v118, 16
  %v304 = vpop.permute.xlu0 %303
  %v306 = vsel %vm121, %v302, 0
  %v309 = vsel %vm121, %v304, 0
  %311 = vmatpush.bf16.xpose.msra.mxu0 0
  %312 = vmatpush.bf16.xpose.msra.mxu0 0
  %313 = vmatpush.bf16.xpose.msra.mxu0 0
  %314 = vmatpush.bf16.xpose.msra.mxu0 0
  %315 = vmatpush.bf16.xpose.msra.mxu0 0
  %316 = vmatpush.bf16.xpose.msra.mxu0 0
  %317 = vmatpush.bf16.xpose.msra.mxu0 0
  %318 = vmatpush.bf16.xpose.msra.mxu0 %v309
  %319 = vmatmul.bf16.gmra.mxu0 %v306
  %v320 = vpop.f32.mrf.mxu0
  %v321 = vadd.f32 0.0, %v320
  %v322 = vpop.f32.mrf.mxu0
  %323 = vdwg.mxu0
  %v324 = vsel %vm141, %v321, -inf
  %325 = vmax.xlane.f32.xlu0 %v324
  %v326 = vpop.xlane.xlu0 %325
  %v327 = vsub.f32 %v321, %v326
  %v328 = vmul.f32 %v327, 1.442695
  %v329 = vpow.pop %v328
  %v330 = vsel %vm141, %v329, 0.0
  %331 = vadd.xlane.f32.xlu0 %v330
  %v332 = vpop.xlane.xlu0 %331
  %v333 = vrcp.pop %v332
  %v334 = vpack.c.bf16 %v329, %v329
  %335 = vrot.lane.b32.xlu0 %v154, 80
  %v336 = vpop.permute.xlu0 %335
  %v338 = vsel %vm141, %v334, 0
  %v341 = vsel %vm158, %v336, 0
  %343 = vmatpush.bf16.msra.mxu0 0
  %344 = vmatpush.bf16.msra.mxu0 0
  %345 = vmatpush.bf16.msra.mxu0 0
  %346 = vmatpush.bf16.msra.mxu0 0
  %347 = vmatpush.bf16.msra.mxu0 0
  %348 = vmatpush.bf16.msra.mxu0 0
  %349 = vmatpush.bf16.msra.mxu0 0
  %350 = vmatpush.bf16.msra.mxu0 %v341
  %351 = vmatmul.bf16.gmra.mxu0 %v338
  %v352 = vpop.f32.mrf.mxu0
  %v353 = vadd.f32 0.0, %v352
  %v354 = vpop.f32.mrf.mxu0
  %355 = vdwg.mxu0
  %v356 = vmul.f32 %v353, %v333
  %358 = vrot.lane.b32.xlu0 %v356, 48
  %v359 = vpop.permute.xlu0 %358
  %vm361 = vcmask 523648
  %362 = vst.msk [vmem:[%s2] sm:$0xff] %vm361, %v359
  // Predicated region
  $region10: #{test_model_forward.1} parent=0 // pred_check
    _
  $region11: #{test_model_forward.1} parent=0 // pred_check_branch
    %364 = sbr.rel (0) target = $region13
  $region12: #{test_model_forward.1} parent=0 // pred_region
    _
  $region13: #{test_model_forward.1} parent=0 // pred_fallthru
    _
  // Predicated region
  $region14: #{test_model_forward.1} parent=0 // pred_check
    _
  $region15: #{test_model_forward.1} parent=0 // pred_check_branch
    %366 = sbr.rel (0) target = $region17
  $region16: #{test_model_forward.1} parent=0 // pred_region
    _
  $region17: #{test_model_forward.1} parent=0 // pred_fallthru
    _

</llo_original>
